<compile_context>
chip_gen: v7x
topology: tpu7x:2x2x1
jax: 0.10.0
libtpu: 0.0.40
codegen_flags: <defaults>
</compile_context>

<pallas_src>
import functools

import jax
import jax.numpy as jnp
from jax import lax
from jax.experimental import pallas as pl
from jax.experimental.pallas import tpu as pltpu

LANES = 128
BLOCK_ROWS = 1024  # rows of 128 lanes per grid step (sweepable: 512/1024/2048)


def _loss_kernel(joy_ref, other_ref, out_ref, *, block_rows, n_rows, needs_mask):
    # Upcast to f32 in-kernel and accumulate in f32 (required on v5e anyway).
    prod = joy_ref[...].astype(jnp.float32) * other_ref[...].astype(jnp.float32)
    val = jnp.abs(prod)  # torch.clamp(|x|, min=0) == |x|; clamp is a no-op
    if needs_mask:
        # Zero out rows of the (padded) boundary block that lie past n_rows.
        row = (pl.program_id(0) * block_rows
               + lax.broadcasted_iota(jnp.int32, val.shape, 0))
        val = jnp.where(row < n_rows, val, jnp.float32(0.0))
    # Per-lane partial sums for this block; the final cross-lane reduce is done
    # once outside the kernel (keeps the per-step hot path on the VPU).
    out_ref[...] = jnp.sum(val, axis=0, keepdims=True)


def joy_other_loss(joy: jax.Array, other: jax.Array) -> jax.Array:
    # torch broadcasting semantics for joy * other.
    joy, other = jnp.broadcast_arrays(joy, other)
    out_dtype = jnp.result_type(joy.dtype, other.dtype)
    n = joy.size

    flat_j = joy.reshape(-1)   # free reshape, native dtype (no HBM copy)
    flat_o = other.reshape(-1)

    n_rows = n // LANES
    n_main = n_rows * LANES

    tail_sum = jnp.float32(0.0)
    if n_main != n:
        # Ragged tail (< 128 elements): sum in plain JAX, negligible traffic.
        tj = flat_j[n_main:].astype(jnp.float32)
        to = flat_o[n_main:].astype(jnp.float32)
        tail_sum = jnp.sum(jnp.abs(tj * to))
        flat_j = flat_j[:n_main]
        flat_o = flat_o[:n_main]

    if n_rows == 0:
        return (tail_sum / jnp.float32(n)).astype(out_dtype)

    j2 = flat_j.reshape(n_rows, LANES)
    o2 = flat_o.reshape(n_rows, LANES)

    # Pick a block row count that is a multiple of 8 (or the full row extent).
    if n_rows % 8 == 0:
        block_rows = min(BLOCK_ROWS, n_rows)
    elif n_rows < 8:
        block_rows = n_rows  # full extent is always a legal block dim
    else:
        block_rows = min(BLOCK_ROWS, (n_rows // 8) * 8)

    num_blocks = pl.cdiv(n_rows, block_rows)
    needs_mask = (n_rows % block_rows) != 0

    kern = functools.partial(
        _loss_kernel,
        block_rows=block_rows,
        n_rows=n_rows,
        needs_mask=needs_mask,
    )

    bytes_accessed = (n_main * (flat_j.dtype.itemsize + flat_o.dtype.itemsize)
                      + num_blocks * LANES * 4)
    cost = pl.CostEstimate(
        flops=3 * n_main, transcendentals=0, bytes_accessed=bytes_accessed)

    partials = pl.pallas_call(
        kern,
        out_shape=jax.ShapeDtypeStruct((num_blocks, LANES), jnp.float32),
        grid_spec=pltpu.PrefetchScalarGridSpec(
            num_scalar_prefetch=0,
            grid=(num_blocks,),
            in_specs=[
                pl.BlockSpec((block_rows, LANES), lambda i: (i, 0)),
                pl.BlockSpec((block_rows, LANES), lambda i: (i, 0)),
            ],
            out_specs=pl.BlockSpec((1, LANES), lambda i: (i, 0)),
        ),
        compiler_params=pltpu.CompilerParams(
            dimension_semantics=("parallel",)),
        cost_estimate=cost,
    )(j2, o2)

    total = jnp.sum(partials, dtype=jnp.float32) + tail_sum
    return (total / jnp.float32(n)).astype(out_dtype)


if __name__ == "__main__":
    key = jax.random.PRNGKey(0)
    k1, k2, k3, k4 = jax.random.split(key, 4)

    # 1) Small NCHW-shaped f32 inputs (aligned case).
    joy = jax.random.normal(k1, (2, 4, 16, 16), dtype=jnp.float32)
    other = jax.random.normal(k2, (2, 4, 16, 16), dtype=jnp.float32)
    loss = joy_other_loss(joy, other)
    jax.block_until_ready(loss)
    ref = jnp.mean(jnp.abs(joy * other))
    assert jnp.allclose(loss, ref, rtol=1e-5, atol=1e-6), (loss, ref)

    # 2) Ragged size (exercises boundary-block masking + plain-JAX tail path).
    joy_r = jax.random.normal(k3, (3, 5, 7, 11), dtype=jnp.float32)
    other_r = jax.random.normal(k4, (3, 5, 7, 11), dtype=jnp.float32)
    loss_r = joy_other_loss(joy_r, other_r)
    jax.block_until_ready(loss_r)
    ref_r = jnp.mean(jnp.abs(joy_r * other_r))
    assert jnp.allclose(loss_r, ref_r, rtol=1e-5, atol=1e-6), (loss_r, ref_r)

    # 3) bf16 inputs (exercises native-dtype load + in-kernel f32 upcast).
    joy_b = joy.astype(jnp.bfloat16)
    other_b = other.astype(jnp.bfloat16)
    loss_b = joy_other_loss(joy_b, other_b)
    jax.block_until_ready(loss_b)
    ref_b = jnp.mean(jnp.abs(joy_b.astype(jnp.float32) * other_b.astype(jnp.float32)))
    assert jnp.allclose(loss_b.astype(jnp.float32), ref_b, rtol=2e-2, atol=1e-3), (
        loss_b, ref_b)

    print("KERNEL_OK")
</pallas_src>

<mosaic_0001>
module attributes {stable_mosaic.version = 11 : i64} {
  func.func @_loss_kernel(%arg0: i32, %arg1: memref<16x128xf32, #tpu.memory_space<vmem>>, %arg2: memref<16x128xf32, #tpu.memory_space<vmem>>, %arg3: memref<1x128xf32, #tpu.memory_space<vmem>>) attributes {dimension_semantics = [#tpu.dimension_semantics<parallel>], iteration_bounds = array<i64: 1>, scalar_prefetch = 0 : i64, scratch_operands = 0 : i64, tpu.core_type = #tpu.core_type<tc>, window_params = [{transform_indices = @transform_0, window_bounds = array<i64: 16, 128>}, {transform_indices = @transform_1, window_bounds = array<i64: 16, 128>}, {transform_indices = @transform_2, window_bounds = array<i64: 1, 128>}]} {
    %c0 = arith.constant 0 : index
    %c0_0 = arith.constant 0 : index
    %0 = vector.load %arg1[%c0, %c0_0] : memref<16x128xf32, #tpu.memory_space<vmem>>, vector<16x128xf32>
    %c0_1 = arith.constant 0 : index
    %c0_2 = arith.constant 0 : index
    %1 = vector.load %arg2[%c0_1, %c0_2] : memref<16x128xf32, #tpu.memory_space<vmem>>, vector<16x128xf32>
    %2 = arith.mulf %0, %1 : vector<16x128xf32>
    %3 = math.absf %2 : vector<16x128xf32>
    %cst = arith.constant dense<0.000000e+00> : vector<128xf32>
    %4 = vector.multi_reduction <add>, %3, %cst [0] : vector<16x128xf32> to vector<128xf32>
    %5 = vector.shape_cast %4 : vector<128xf32> to vector<1x128xf32>
    %c0_3 = arith.constant 0 : index
    %c0_4 = arith.constant 0 : index
    %6 = vector.load %arg3[%c0_3, %c0_4] : memref<1x128xf32, #tpu.memory_space<vmem>>, vector<1x128xf32>
    tpu.vector_store %arg3[%c0_3, %c0_4], %5 {strides = array<i32>} : memref<1x128xf32, #tpu.memory_space<vmem>>, vector<1x128xf32>,
    return
  }
  func.func @transform_0(%arg0: i32) -> (i32, i32) {
    %c0_i32 = arith.constant 0 : i32
    %c0_i32_0 = arith.constant 0 : i32
    return %arg0, %c0_i32 : i32, i32
  }
  func.func @transform_1(%arg0: i32) -> (i32, i32) {
    %c0_i32 = arith.constant 0 : i32
    %c0_i32_0 = arith.constant 0 : i32
    return %arg0, %c0_i32 : i32, i32
  }
  func.func @transform_2(%arg0: i32) -> (i32, i32) {
    %c0_i32 = arith.constant 0 : i32
    %c0_i32_0 = arith.constant 0 : i32
    return %arg0, %c0_i32 : i32, i32
  }
}

</mosaic_0001>

<llo_original>
// kernel: tpu_custom_call.1
$region0: #{tpu_custom_call.1}
  #allocation0 [shape = 'u32[]', space=smem, size = 0x4, offset = 0x4, fixed_abs, tag = 'smem constant byte address 0x4 - core index']
  #allocation1 [shape = 'u32[144,128]{1,0:T(1,128)}', space=vmem, size = 0x12000, scoped, tag = 'internal scratch']
  %s0 = inlined_call_operand.hbm [shape: f32[16,128], index: 0, kind: input, shape index: {}]
  %s1 = inlined_call_operand.hbm [shape: f32[16,128], index: 1, kind: input, shape index: {}]
  %s2 = inlined_call_operand.hbm [shape: f32[1,128], index: 2, kind: output, shape index: {}]
  %s3 = sld [smem:[#allocation0]]
  $region26: #{tpu_custom_call.1} parent=0
    _
  %s5 = ssub.s32 1, %s3
  %s6 = scalar_select 0, %s5, %s3
  $region1: #{tpu_custom_call.1} parent=0
    #allocation2 [shape = 'u8[8192]{0}', space=vmem, size = 0x2000, scoped, tag = 'input window, operand 0, single buffered']
    #allocation3 [shape = 's32[1]{0}', space=sflag, size = 0x4, scoped, tag = 'scoped memory for tpu_custom_call.1']
    #allocation4 [shape = 's32[1]{0}', space=sflag, size = 0x4, scoped, tag = 'scoped memory for tpu_custom_call.1']
    #allocation5 [shape = 'u8[8192]{0}', space=vmem, size = 0x2000, scoped, tag = 'input window, operand 1, single buffered']
    #allocation6 [shape = 's32[1]{0}', space=sflag, size = 0x4, scoped, tag = 'scoped memory for tpu_custom_call.1']
    #allocation7 [shape = 'u8[512]{0}', space=vmem, size = 0x400, scoped, tag = 'output window, operand 0, single buffered']
    %7 = vsyncpa [#allocation3], 0
    %8 = vsyncpa [#allocation6], 0
    %9 = vsyncpa [#allocation4], 0
    // Predicated region
    $region2: #{tpu_custom_call.1} parent=1 // pred_check
      _
    $region3: #{tpu_custom_call.1} parent=1 // pred_check_branch
      %11 = sbr.rel (0) target = $region5
    $region4: #{tpu_custom_call.1} parent=1 // pred_region
      %s13 = ssub.s32 256, 256
      %14 = vsyncadd [#allocation3], %s13
      %s15 = sshll.u32 [#allocation2], 4
      %s16 = int_to_ptr.vmem [resolvable:$true] %s15
      %21 = dma.hbm_to_vmem [thread:$0]  %s0, 256, %s16, [#allocation3], 128, 128, 8
    $region5: #{tpu_custom_call.1} parent=1 // pred_fallthru
      _
    // Predicated region
    $region6: #{tpu_custom_call.1} parent=1 // pred_check
      _
    $region7: #{tpu_custom_call.1} parent=1 // pred_check_branch
      %23 = sbr.rel (0) target = $region9
    $region8: #{tpu_custom_call.1} parent=1 // pred_region
      %s25 = ssub.s32 256, 256
      %26 = vsyncadd [#allocation6], %s25
      %s27 = sshll.u32 [#allocation5], 4
      %s28 = int_to_ptr.vmem [resolvable:$true] %s27
      %33 = dma.hbm_to_vmem [thread:$0]  %s1, 256, %s28, [#allocation6], 128, 128, 8
    $region9: #{tpu_custom_call.1} parent=1 // pred_fallthru
      _
    // Predicated region
    $region10: #{tpu_custom_call.1} parent=1 // pred_check
      _
    $region11: #{tpu_custom_call.1} parent=1 // pred_check_branch
      %35 = sbr.rel (0) target = $region13
    $region12: #{tpu_custom_call.1} parent=1 // pred_region
      %36 = dma.done [#allocation3], 256
    $region13: #{tpu_custom_call.1} parent=1 // pred_fallthru
      _
    // Predicated region
    $region14: #{tpu_custom_call.1} parent=1 // pred_check
      _
    $region15: #{tpu_custom_call.1} parent=1 // pred_check_branch
      %38 = sbr.rel (0) target = $region17
    $region16: #{tpu_custom_call.1} parent=1 // pred_region
      %39 = dma.done [#allocation6], 256
    $region17: #{tpu_custom_call.1} parent=1 // pred_fallthru
      _
    %v40 = vld [vmem:[#allocation2] sm:$0xff]
    %v41 = vld [vmem:[#allocation2 + $0x8] sm:$0xff]
    %v42 = vld [vmem:[#allocation5] sm:$0xff]
    %v43 = vld [vmem:[#allocation5 + $0x8] sm:$0xff]
    %v44 = vmul.f32 %v40, %v42
    %v45 = vmul.f32 %v41, %v43
    %v46 = vand.u32 2147483647, %v44
    %v47 = vand.u32 2147483647, %v45
    %v48 = vadd.f32 %v46, %v47
    %v49 = vrot.slane %v48, 4
    %v50 = vadd.f32 %v48, %v49
    %v51 = vrot.slane %v50, 2
    %v52 = vadd.f32 %v50, %v51
    %v53 = vrot.slane %v52, 1
    %v54 = vadd.f32 %v52, %v53
    %55 = vst [vmem:[#allocation7] sm:$0x1] %v54
    // Predicated region
    $region18: #{tpu_custom_call.1} parent=1 // pred_check
      _
    $region19: #{tpu_custom_call.1} parent=1 // pred_check_branch
      %57 = sbr.rel (0) target = $region21
    $region20: #{tpu_custom_call.1} parent=1 // pred_region
      %s59 = ssub.s32 16, 16
      %60 = vsyncadd [#allocation4], %s59
      %s62 = sshll.u32 [#allocation7], 4
      %s63 = int_to_ptr.vmem [resolvable:$true] %s62
      %65 = dma.vmem_to_hbm [thread:$0]  %s63, 16, %s2, [#allocation4]
    $region21: #{tpu_custom_call.1} parent=1 // pred_fallthru
      _
    // Predicated region
    $region22: #{tpu_custom_call.1} parent=1 // pred_check
      _
    $region23: #{tpu_custom_call.1} parent=1 // pred_check_branch
      %67 = sbr.rel (0) target = $region25
    $region24: #{tpu_custom_call.1} parent=1 // pred_region
      %68 = dma.done [#allocation4], 16
    $region25: #{tpu_custom_call.1} parent=1 // pred_fallthru
      _
    %69 = vsyncpa [#allocation3], 1
    %70 = vsyncpa [#allocation6], 1
    %71 = vsyncpa [#allocation4], 1

</llo_original>
